<compile_context>
chip_gen: v7x
topology: tpu7x:2x2x1
jax: 0.10.0
libtpu: 0.0.40
codegen_flags: <defaults>
</compile_context>

<pallas_src>
import functools

import jax
import jax.numpy as jnp
from jax.experimental import pallas as pl
from jax.experimental.pallas import tpu as pltpu

LANES = 128
NUM_CORES = 2          # leading "parallel" grid axis: uses both TCs on v7x,
                       # harmless (serialized) on single-TC v5e/v6e.
DEFAULT_TILE_ROWS = 1024


def _cdiv(a, b):
    return -(-a // b)


def _round_up(a, b):
    return _cdiv(a, b) * b


def _combo_kernel(x_ref, t_ref, part_ref, acc_ref, *, alpha, eps, binary_targets):
    i = pl.program_id(1)  # reduction-axis step (per core)

    @pl.when(i == 0)
    def _init():
        acc_ref[...] = jnp.zeros_like(acc_ref)

    # cast once per tile; all arithmetic in f32 (required on v5e, cheap everywhere)
    x = x_ref[...].astype(jnp.float32)
    t = t_ref[...].astype(jnp.float32)
    lanes = x.shape[-1]

    # NOTE: eps=1e-9 mirrors the PyTorch f32 behaviour (1.0 - eps rounds to 1.0 in f32,
    # so an input exactly equal to 1.0 yields log(0) = -inf, same as torch.clamp).
    xc = jnp.clip(x, eps, 1.0 - eps)
    if binary_targets:
        # Exact for t in {0, 1}: one log per element instead of two (halves EUP work).
        pos = t > 0.5
        logarg = jnp.where(pos, xc, 1.0 - xc)
        weight = jnp.where(pos, alpha, alpha * (1.0 - alpha))
        ce = -weight * jnp.log(logarg)
    else:
        # Literal PyTorch formula (valid for soft targets).
        ce = -(alpha * (t * jnp.log(xc)
                        + (1.0 - alpha) * (1.0 - t) * jnp.log(1.0 - xc)))

    def fold(v):
        # (TR, 128) -> (TR//8, 8, 128) is a layout no-op; summing the leading axis is
        # pure VALU vreg adds (no XLU cross-lane reduce per tile).
        return jnp.sum(v.reshape(-1, 8, lanes), axis=0)

    acc_ref[0] += fold(x * t)   # intersection
    acc_ref[1] += fold(x)       # sum(inputs)
    acc_ref[2] += fold(t)       # sum(targets)
    acc_ref[3] += fold(ce)      # sum(weighted CE)

    @pl.when(i == pl.num_programs(1) - 1)
    def _finalize():
        part_ref[0] = acc_ref[...]


def combo_loss(inputs, targets, smooth=1.0, alpha=0.5, beta=0.5, CE_RATIO=0.5,
               eps=1e-9, binary_targets=True, tile_rows=DEFAULT_TILE_ROWS,
               num_cores=NUM_CORES):
    """Pallas implementation of ComboLoss.forward. Returns a scalar f32.

    `binary_targets=True` (default) assumes targets in {0, 1} (the intended use of
    this loss) and computes one log per element; set False for soft targets to use
    the literal two-log formula. `beta` is accepted but unused, mirroring PyTorch.
    """
    del beta  # unused by the original PyTorch module as well

    x = inputs.reshape(-1)
    t = targets.reshape(-1)
    n = x.shape[0]

    rows_needed = _cdiv(n, LANES)
    per_core = _round_up(_cdiv(rows_needed, num_cores), 8)
    tr = max(8, min(int(tile_rows), per_core))
    steps = _cdiv(rows_needed, num_cores * tr)
    rows_padded = num_cores * steps * tr
    pad = rows_padded * LANES - n

    # Keep native dtype (bf16 halves HBM traffic); only zero-pad the tail.
    x2 = jnp.pad(x, (0, pad)).reshape(rows_padded, LANES)
    t2 = jnp.pad(t, (0, pad)).reshape(rows_padded, LANES)

    kernel = functools.partial(
        _combo_kernel,
        alpha=float(alpha),
        eps=float(eps),
        binary_targets=bool(binary_targets),
    )

    out = pl.pallas_call(
        kernel,
        out_shape=jax.ShapeDtypeStruct((num_cores, 4, 8, LANES), jnp.float32),
        grid_spec=pltpu.PrefetchScalarGridSpec(
            num_scalar_prefetch=0,
            grid=(num_cores, steps),
            in_specs=[
                pl.BlockSpec((tr, LANES), lambda c, i: (c * steps + i, 0)),
                pl.BlockSpec((tr, LANES), lambda c, i: (c * steps + i, 0)),
            ],
            out_specs=pl.BlockSpec((1, 4, 8, LANES), lambda c, i: (c, 0, 0, 0)),
            scratch_shapes=[pltpu.VMEM((4, 8, LANES), jnp.float32)],
        ),
        compiler_params=pltpu.CompilerParams(
            dimension_semantics=("parallel", "arbitrary")),
        cost_estimate=pl.CostEstimate(
            flops=16 * n,
            transcendentals=(n if binary_targets else 2 * n),
            bytes_accessed=n * (x2.dtype.itemsize + t2.dtype.itemsize)
            + num_cores * 4 * 8 * LANES * 4,
        ),
    )(x2, t2)

    # Tiny finalize in XLA: combine per-core vreg partials into 4 scalars.
    parts = jnp.sum(out, axis=(0, 2, 3))
    inter, sum_x, sum_t, ce_sum = parts[0], parts[1], parts[2], parts[3]

    dice = (2.0 * inter + smooth) / (sum_x + sum_t + smooth)

    if pad:
        # Zero padding (x=0 -> clipped to eps, t=0) adds a constant per padded element
        # to the CE sum; remove it analytically using the same f32 math as the kernel.
        # (For the default eps=1e-9 this constant is exactly 0.0 in f32.)
        xc0 = jnp.clip(jnp.float32(0.0), jnp.float32(eps), jnp.float32(1.0 - eps))
        pad_ce = -(alpha * (1.0 - alpha)) * jnp.log(jnp.float32(1.0) - xc0)
        ce_sum = ce_sum - jnp.float32(pad) * pad_ce

    weighted_ce = ce_sum / jnp.float32(n)
    return CE_RATIO * weighted_ce - (1.0 - CE_RATIO) * dice


def _combo_loss_ref(inputs, targets, smooth=1.0, alpha=0.5, CE_RATIO=0.5, eps=1e-9):
    x = inputs.reshape(-1).astype(jnp.float32)
    t = targets.reshape(-1).astype(jnp.float32)
    inter = jnp.sum(x * t)
    dice = (2.0 * inter + smooth) / (jnp.sum(x) + jnp.sum(t) + smooth)
    xc = jnp.clip(x, eps, 1.0 - eps)
    out = -(alpha * (t * jnp.log(xc) + (1 - alpha) * (1.0 - t) * jnp.log(1.0 - xc)))
    return CE_RATIO * jnp.mean(out) - (1 - CE_RATIO) * dice


if __name__ == "__main__":
    key = jax.random.PRNGKey(0)
    k1, k2, k3, k4 = jax.random.split(key, 4)

    # inputs are probabilities in (0, 1) (NCHW), targets are binary masks
    inputs = jax.nn.sigmoid(jax.random.normal(k1, (2, 4, 16, 16), dtype=jnp.float32))
    targets = (jax.random.uniform(k2, (2, 4, 16, 16)) > 0.5).astype(jnp.float32)

    # 1) f32, binary targets (default single-log path)
    result = combo_loss(inputs, targets)
    jax.block_until_ready(result)
    ref = _combo_loss_ref(inputs, targets)
    assert jnp.allclose(result, ref, atol=1e-5, rtol=1e-5), (result, ref)

    # 2) bf16 inputs/targets (native-dtype path, half the HBM traffic)
    result_b = combo_loss(inputs.astype(jnp.bfloat16), targets.astype(jnp.bfloat16))
    jax.block_until_ready(result_b)
    ref_b = _combo_loss_ref(inputs.astype(jnp.bfloat16), targets.astype(jnp.bfloat16))
    assert jnp.allclose(result_b, ref_b, atol=1e-4, rtol=1e-4), (result_b, ref_b)

    # 3) non-128-divisible size (exercises tail padding + analytic CE correction)
    inputs_odd = jax.nn.sigmoid(jax.random.normal(k3, (1, 3, 7, 11), dtype=jnp.float32))
    targets_odd = (jax.random.uniform(k4, (1, 3, 7, 11)) > 0.5).astype(jnp.float32)
    result_o = combo_loss(inputs_odd, targets_odd)
    jax.block_until_ready(result_o)
    ref_o = _combo_loss_ref(inputs_odd, targets_odd)
    assert jnp.allclose(result_o, ref_o, atol=1e-5, rtol=1e-5), (result_o, ref_o)

    # 4) soft (non-binary) targets via the literal two-log formula
    soft_t = jax.random.uniform(k3, (2, 4, 16, 16), dtype=jnp.float32)
    result_s = combo_loss(inputs, soft_t, binary_targets=False)
    jax.block_until_ready(result_s)
    ref_s = _combo_loss_ref(inputs, soft_t)
    assert jnp.allclose(result_s, ref_s, atol=1e-5, rtol=1e-5), (result_s, ref_s)

    print("KERNEL_OK")
</pallas_src>

<mosaic_0001>
module attributes {stable_mosaic.version = 11 : i64} {
  func.func @_combo_kernel(%arg0: i32, %arg1: i32, %arg2: memref<8x128xf32, #tpu.memory_space<vmem>>, %arg3: memref<8x128xf32, #tpu.memory_space<vmem>>, %arg4: memref<1x4x8x128xf32, #tpu.memory_space<vmem>>, %arg5: memref<4x8x128xf32, #tpu.memory_space<vmem>>) attributes {dimension_semantics = [#tpu.dimension_semantics<parallel>, #tpu.dimension_semantics<arbitrary>], iteration_bounds = array<i64: 2, 1>, scalar_prefetch = 0 : i64, scratch_operands = 1 : i64, tpu.core_type = #tpu.core_type<tc>, window_params = [{transform_indices = @transform_0, window_bounds = array<i64: 8, 128>}, {transform_indices = @transform_1, window_bounds = array<i64: 8, 128>}, {transform_indices = @transform_2, window_bounds = array<i64: 1, 4, 8, 128>}]} {
    %c0_i32 = arith.constant 0 : i32
    %0 = arith.cmpi eq, %arg1, %c0_i32 : i32
    %1 = arith.extui %0 : i1 to i32
    %c0_i32_0 = arith.constant 0 : i32
    %2 = arith.cmpi ne, %1, %c0_i32_0 : i32
    scf.if %2 {
      %cst_37 = arith.constant 0.000000e+00 : f32
      %57 = vector.broadcast %cst_37 : f32 to vector<4x8x128xf32>
      %c0_38 = arith.constant 0 : index
      %c0_39 = arith.constant 0 : index
      %c0_40 = arith.constant 0 : index
      %58 = vector.load %arg5[%c0_38, %c0_39, %c0_40] : memref<4x8x128xf32, #tpu.memory_space<vmem>>, vector<4x8x128xf32>
      tpu.vector_store %arg5[%c0_38, %c0_39, %c0_40], %57 {strides = array<i32>} : memref<4x8x128xf32, #tpu.memory_space<vmem>>, vector<4x8x128xf32>,
    } else {
    }
    %c0 = arith.constant 0 : index
    %c0_1 = arith.constant 0 : index
    %3 = vector.load %arg2[%c0, %c0_1] : memref<8x128xf32, #tpu.memory_space<vmem>>, vector<8x128xf32>
    %c0_2 = arith.constant 0 : index
    %c0_3 = arith.constant 0 : index
    %4 = vector.load %arg3[%c0_2, %c0_3] : memref<8x128xf32, #tpu.memory_space<vmem>>, vector<8x128xf32>
    %cst = arith.constant 9.99999971E-10 : f32
    %cst_4 = arith.constant 1.000000e+00 : f32
    %5 = vector.broadcast %cst : f32 to vector<8x128xf32>
    %6 = arith.maximumf %5, %3 : vector<8x128xf32>
    %7 = vector.broadcast %cst_4 : f32 to vector<8x128xf32>
    %8 = arith.minimumf %7, %6 : vector<8x128xf32>
    %cst_5 = arith.constant 5.000000e-01 : f32
    %9 = vector.broadcast %cst_5 : f32 to vector<8x128xf32>
    %10 = arith.cmpf ogt, %4, %9 : vector<8x128xf32>
    %cst_6 = arith.constant 1.000000e+00 : f32
    %11 = vector.broadcast %cst_6 : f32 to vector<8x128xf32>
    %12 = arith.subf %11, %8 : vector<8x128xf32>
    %13 = arith.select %10, %8, %12 : vector<8x128xi1>, vector<8x128xf32>
    %cst_7 = arith.constant 5.000000e-01 : f32
    %cst_8 = arith.constant 2.500000e-01 : f32
    %14 = vector.broadcast %cst_7 : f32 to vector<8x128xf32>
    %15 = vector.broadcast %cst_8 : f32 to vector<8x128xf32>
    %16 = arith.select %10, %14, %15 : vector<8x128xi1>, vector<8x128xf32>
    %cst_9 = arith.constant 0.000000e+00 : f32
    %17 = vector.broadcast %cst_9 : f32 to vector<8x128xf32>
    %18 = arith.subf %17, %16 : vector<8x128xf32>
    %19 = math.log %13 : vector<8x128xf32>
    %20 = arith.mulf %18, %19 : vector<8x128xf32>
    %c0_10 = arith.constant 0 : index
    %c0_11 = arith.constant 0 : index
    %c0_12 = arith.constant 0 : index
    %21 = vector.load %arg5[%c0_10, %c0_11, %c0_12] : memref<4x8x128xf32, #tpu.memory_space<vmem>>, vector<1x8x128xf32>
    %22 = vector.shape_cast %21 : vector<1x8x128xf32> to vector<8x128xf32>
    %23 = arith.mulf %3, %4 : vector<8x128xf32>
    %24 = vector.shape_cast %23 : vector<8x128xf32> to vector<1x8x128xf32>
    %cst_13 = arith.constant dense<0.000000e+00> : vector<8x128xf32>
    %25 = vector.multi_reduction <add>, %24, %cst_13 [0] : vector<1x8x128xf32> to vector<8x128xf32>
    %26 = arith.addf %22, %25 : vector<8x128xf32>
    %c0_14 = arith.constant 0 : index
    %c0_15 = arith.constant 0 : index
    %c0_16 = arith.constant 0 : index
    %27 = vector.load %arg5[%c0_14, %c0_15, %c0_16] : memref<4x8x128xf32, #tpu.memory_space<vmem>>, vector<1x8x128xf32>
    %28 = vector.shape_cast %27 : vector<1x8x128xf32> to vector<8x128xf32>
    %29 = vector.shape_cast %26 : vector<8x128xf32> to vector<1x8x128xf32>
    tpu.vector_store %arg5[%c0_14, %c0_15, %c0_16], %29 {strides = array<i32>} : memref<4x8x128xf32, #tpu.memory_space<vmem>>, vector<1x8x128xf32>,
    %c1 = arith.constant 1 : index
    %c0_17 = arith.constant 0 : index
    %c0_18 = arith.constant 0 : index
    %30 = vector.load %arg5[%c1, %c0_17, %c0_18] : memref<4x8x128xf32, #tpu.memory_space<vmem>>, vector<1x8x128xf32>
    %31 = vector.shape_cast %30 : vector<1x8x128xf32> to vector<8x128xf32>
    %32 = vector.shape_cast %3 : vector<8x128xf32> to vector<1x8x128xf32>
    %cst_19 = arith.constant dense<0.000000e+00> : vector<8x128xf32>
    %33 = vector.multi_reduction <add>, %32, %cst_19 [0] : vector<1x8x128xf32> to vector<8x128xf32>
    %34 = arith.addf %31, %33 : vector<8x128xf32>
    %c1_20 = arith.constant 1 : index
    %c0_21 = arith.constant 0 : index
    %c0_22 = arith.constant 0 : index
    %35 = vector.load %arg5[%c1_20, %c0_21, %c0_22] : memref<4x8x128xf32, #tpu.memory_space<vmem>>, vector<1x8x128xf32>
    %36 = vector.shape_cast %35 : vector<1x8x128xf32> to vector<8x128xf32>
    %37 = vector.shape_cast %34 : vector<8x128xf32> to vector<1x8x128xf32>
    tpu.vector_store %arg5[%c1_20, %c0_21, %c0_22], %37 {strides = array<i32>} : memref<4x8x128xf32, #tpu.memory_space<vmem>>, vector<1x8x128xf32>,
    %c2 = arith.constant 2 : index
    %c0_23 = arith.constant 0 : index
    %c0_24 = arith.constant 0 : index
    %38 = vector.load %arg5[%c2, %c0_23, %c0_24] : memref<4x8x128xf32, #tpu.memory_space<vmem>>, vector<1x8x128xf32>
    %39 = vector.shape_cast %38 : vector<1x8x128xf32> to vector<8x128xf32>
    %40 = vector.shape_cast %4 : vector<8x128xf32> to vector<1x8x128xf32>
    %cst_25 = arith.constant dense<0.000000e+00> : vector<8x128xf32>
    %41 = vector.multi_reduction <add>, %40, %cst_25 [0] : vector<1x8x128xf32> to vector<8x128xf32>
    %42 = arith.addf %39, %41 : vector<8x128xf32>
    %c2_26 = arith.constant 2 : index
    %c0_27 = arith.constant 0 : index
    %c0_28 = arith.constant 0 : index
    %43 = vector.load %arg5[%c2_26, %c0_27, %c0_28] : memref<4x8x128xf32, #tpu.memory_space<vmem>>, vector<1x8x128xf32>
    %44 = vector.shape_cast %43 : vector<1x8x128xf32> to vector<8x128xf32>
    %45 = vector.shape_cast %42 : vector<8x128xf32> to vector<1x8x128xf32>
    tpu.vector_store %arg5[%c2_26, %c0_27, %c0_28], %45 {strides = array<i32>} : memref<4x8x128xf32, #tpu.memory_space<vmem>>, vector<1x8x128xf32>,
    %c3 = arith.constant 3 : index
    %c0_29 = arith.constant 0 : index
    %c0_30 = arith.constant 0 : index
    %46 = vector.load %arg5[%c3, %c0_29, %c0_30] : memref<4x8x128xf32, #tpu.memory_space<vmem>>, vector<1x8x128xf32>
    %47 = vector.shape_cast %46 : vector<1x8x128xf32> to vector<8x128xf32>
    %48 = vector.shape_cast %20 : vector<8x128xf32> to vector<1x8x128xf32>
    %cst_31 = arith.constant dense<0.000000e+00> : vector<8x128xf32>
    %49 = vector.multi_reduction <add>, %48, %cst_31 [0] : vector<1x8x128xf32> to vector<8x128xf32>
    %50 = arith.addf %47, %49 : vector<8x128xf32>
    %c3_32 = arith.constant 3 : index
    %c0_33 = arith.constant 0 : index
    %c0_34 = arith.constant 0 : index
    %51 = vector.load %arg5[%c3_32, %c0_33, %c0_34] : memref<4x8x128xf32, #tpu.memory_space<vmem>>, vector<1x8x128xf32>
    %52 = vector.shape_cast %51 : vector<1x8x128xf32> to vector<8x128xf32>
    %53 = vector.shape_cast %50 : vector<8x128xf32> to vector<1x8x128xf32>
    tpu.vector_store %arg5[%c3_32, %c0_33, %c0_34], %53 {strides = array<i32>} : memref<4x8x128xf32, #tpu.memory_space<vmem>>, vector<1x8x128xf32>,
    %c0_i32_35 = arith.constant 0 : i32
    %54 = arith.cmpi eq, %arg1, %c0_i32_35 : i32
    %55 = arith.extui %54 : i1 to i32
    %c0_i32_36 = arith.constant 0 : i32
    %56 = arith.cmpi ne, %55, %c0_i32_36 : i32
    scf.if %56 {
      %c0_37 = arith.constant 0 : index
      %c0_38 = arith.constant 0 : index
      %c0_39 = arith.constant 0 : index
      %57 = vector.load %arg5[%c0_37, %c0_38, %c0_39] : memref<4x8x128xf32, #tpu.memory_space<vmem>>, vector<4x8x128xf32>
      %c0_40 = arith.constant 0 : index
      %c0_41 = arith.constant 0 : index
      %c0_42 = arith.constant 0 : index
      %c0_43 = arith.constant 0 : index
      %58 = vector.load %arg4[%c0_40, %c0_41, %c0_42, %c0_43] : memref<1x4x8x128xf32, #tpu.memory_space<vmem>>, vector<1x4x8x128xf32>
      %59 = vector.shape_cast %58 : vector<1x4x8x128xf32> to vector<4x8x128xf32>
      %60 = vector.shape_cast %57 : vector<4x8x128xf32> to vector<1x4x8x128xf32>
      tpu.vector_store %arg4[%c0_40, %c0_41, %c0_42, %c0_43], %60 {strides = array<i32>} : memref<1x4x8x128xf32, #tpu.memory_space<vmem>>, vector<1x4x8x128xf32>,
    } else {
    }
    return
  }
  func.func @transform_0(%arg0: i32, %arg1: i32) -> (i32, i32) {
    %c1_i32 = arith.constant 1 : i32
    %0 = arith.muli %arg0, %c1_i32 : i32
    %1 = arith.addi %0, %arg1 : i32
    %c0_i32 = arith.constant 0 : i32
    %c0_i32_0 = arith.constant 0 : i32
    return %1, %c0_i32 : i32, i32
  }
  func.func @transform_1(%arg0: i32, %arg1: i32) -> (i32, i32) {
    %c1_i32 = arith.constant 1 : i32
    %0 = arith.muli %arg0, %c1_i32 : i32
    %1 = arith.addi %0, %arg1 : i32
    %c0_i32 = arith.constant 0 : i32
    %c0_i32_0 = arith.constant 0 : i32
    return %1, %c0_i32 : i32, i32
  }
  func.func @transform_2(%arg0: i32, %arg1: i32) -> (i32, i32, i32, i32) {
    %c0_i32 = arith.constant 0 : i32
    %c0_i32_0 = arith.constant 0 : i32
    %c0_i32_1 = arith.constant 0 : i32
    %c0_i32_2 = arith.constant 0 : i32
    return %arg0, %c0_i32, %c0_i32_0, %c0_i32_1 : i32, i32, i32, i32
  }
}

</mosaic_0001>

<llo_original>
// kernel: tpu_custom_call.1
$region0: #{tpu_custom_call.1}
  #allocation0 [shape = 'u32[]', space=smem, size = 0x4, offset = 0x4, fixed_abs, tag = 'smem constant byte address 0x4 - core index']
  #allocation1 [shape = 'u32[144,128]{1,0:T(1,128)}', space=vmem, size = 0x12000, scoped, tag = 'internal scratch']
  #allocation2 [shape = 'f32[4,8,128]{2,1,0:T(8,128)}', space=vmem, size = 0x4000, scoped, tag = 'scratch operand']
  %s0 = inlined_call_operand.hbm [shape: f32[16,128], index: 0, kind: input, shape index: {}]
  %s1 = inlined_call_operand.hbm [shape: f32[16,128], index: 1, kind: input, shape index: {}]
  %s2 = inlined_call_operand.hbm [shape: f32[2,4,8,128], index: 2, kind: output, shape index: {}]
  %s3 = sld [smem:[#allocation0]]
  $region57: #{tpu_custom_call.1} parent=0
    _
  %s5 = ssub.s32 1, %s3
  %s6 = scalar_select 0, %s5, %s3
  $region1: #{tpu_custom_call.1} parent=0
    #allocation3 [shape = 'u8[8192]{0}', space=vmem, size = 0x2000, scoped, tag = 'input window, operand 0']
    #allocation4 [shape = 's32[2]{0}', space=sflag, size = 0x8, scoped, tag = 'scoped memory for tpu_custom_call.1']
    #allocation5 [shape = 's32[2]{0}', space=sflag, size = 0x8, scoped, tag = 'scoped memory for tpu_custom_call.1']
    #allocation6 [shape = 'u8[8192]{0}', space=vmem, size = 0x2000, scoped, tag = 'input window, operand 1']
    #allocation7 [shape = 's32[2]{0}', space=sflag, size = 0x8, scoped, tag = 'scoped memory for tpu_custom_call.1']
    #allocation8 [shape = 'u8[32768]{0}', space=vmem, size = 0x8000, scoped, tag = 'output window, operand 0']
    %7 = vsyncpa [#allocation4], 0
    %s8 = scalar_lea.sflag [#allocation4], 1
    %9 = vsyncpa %s8, 0
    %10 = vsyncpa [#allocation7], 0
    %s11 = scalar_lea.sflag [#allocation7], 1
    %12 = vsyncpa %s11, 0
    %13 = vsyncpa [#allocation5], 0
    %s14 = scalar_lea.sflag [#allocation5], 1
    %15 = vsyncpa %s14, 0
    loop: start=0, step=1, limit=4
    $region2: #{tpu_custom_call.1} parent=1 // loop_pre_header
      _
    $region3: #{tpu_custom_call.1} parent=1 // loop_header
      %s17 = sphi 0, %s21
      %p18 = scmp.ge.s32.totalorder %s17, 4
      %s24 = sphi 0, %s36
      %s25 = sphi 0, %s32
      %s26 = sphi 0, %s24
      %s27 = sphi 0, %s25
      %s28 = sphi 0, %s26
      %s29 = sphi 0, %s27
      %s41 = sphi 0, %s43
      %s44 = sphi 0, %s41
      %s45 = sphi 0, %s44
      %s61 = sphi 0, %s45
      %s69 = sphi 0, %s71
      %s72 = sphi 0, %s69
      %s73 = sphi 0, %s72
      %s89 = sphi 0, %s73
      %s95 = sphi 0, %s97
      %s98 = sphi 0, %s95
      %s99 = sphi 0, %s98
      %s115 = sphi 0, %s99
    $region4: #{tpu_custom_call.1} parent=1 // loop_header_branch
      %20 = sbr.rel (%p18) target = $region8
    $region5: #{tpu_custom_call.1} parent=1 // loop_body
      %s22 = ssub.s32 %s17, 1
      %s23 = ssub.s32 %s17, 2
      %s30 = sadd.s32 1, %s25
      %p31 = scmp.ge.s32.totalorder %s30, 1
      %s32 = scalar_select %p31, 0, %s30
      %s33 = sadd.s32 1, %s24
      %s34 = scalar_select %p31, %s33, %s24
      %p35 = scmp.ge.s32.totalorder %s34, 2
      %s36 = scalar_select %p35, 0, %s34
      %s37 = sadd.s32 %s24, %s25
      %s38 = sadd.s32 %s36, %s32
      %s39 = ssub.s32 %s37, %s38
      %p40 = scmp.eq.s32.totalorder %s39, 0
      %s42 = sadd.s32 %s41, 1
      %s43 = scalar_select %p40, %s41, %s42
      %p46 = pneg %p40
      %p47 = scmp.eq.s32.totalorder %s17, 1
      %p48 = por %p46, %p47
      %p49 = scmp.ne.s32.totalorder %s41, %s44
      %p50 = scmp.eq.s32.totalorder %s17, 0
      %p51 = por %p49, %p50
      %p52 = scmp.ne.s32.totalorder %s41, %s44
      %p53 = scmp.eq.s32.totalorder %s22, 1
      %p54 = por %p52, %p53
      %p55 = scmp.ne.s32.totalorder %s44, %s45
      %p56 = scmp.eq.s32.totalorder %s22, 0
      %p57 = por %p55, %p56
      %p58 = scmp.ne.s32.totalorder %s44, %s45
      %p59 = scmp.eq.s32.totalorder %s23, 1
      %p60 = por %p58, %p59
      %p62 = scmp.ne.s32.totalorder %s45, %s61
      %p63 = scmp.eq.s32.totalorder %s23, 0
      %p64 = por %p62, %p63
      %s65 = sadd.s32 %s24, %s25
      %s66 = sadd.s32 %s36, %s32
      %s67 = ssub.s32 %s65, %s66
      %p68 = scmp.eq.s32.totalorder %s67, 0
      %s70 = sadd.s32 %s69, 1
      %s71 = scalar_select %p68, %s69, %s70
      %p74 = pneg %p68
      %p75 = scmp.eq.s32.totalorder %s17, 1
      %p76 = por %p74, %p75
      %p77 = scmp.ne.s32.totalorder %s69, %s72
      %p78 = scmp.eq.s32.totalorder %s17, 0
      %p79 = por %p77, %p78
      %p80 = scmp.ne.s32.totalorder %s69, %s72
      %p81 = scmp.eq.s32.totalorder %s22, 1
      %p82 = por %p80, %p81
      %p83 = scmp.ne.s32.totalorder %s72, %s73
      %p84 = scmp.eq.s32.totalorder %s22, 0
      %p85 = por %p83, %p84
      %p86 = scmp.ne.s32.totalorder %s72, %s73
      %p87 = scmp.eq.s32.totalorder %s23, 1
      %p88 = por %p86, %p87
      %p90 = scmp.ne.s32.totalorder %s73, %s89
      %p91 = scmp.eq.s32.totalorder %s23, 0
      %p92 = por %p90, %p91
      %s93 = ssub.s32 %s24, %s36
      %p94 = scmp.eq.s32.totalorder %s93, 0
      %s96 = sadd.s32 %s95, 1
      %s97 = scalar_select %p94, %s95, %s96
      %p100 = pneg %p94
      %p101 = scmp.eq.s32.totalorder %s17, 1
      %p102 = por %p100, %p101
      %p103 = scmp.ne.s32.totalorder %s95, %s98
      %p104 = scmp.eq.s32.totalorder %s17, 0
      %p105 = por %p103, %p104
      %p106 = scmp.ne.s32.totalorder %s95, %s98
      %p107 = scmp.eq.s32.totalorder %s22, 1
      %p108 = por %p106, %p107
      %p109 = scmp.ne.s32.totalorder %s98, %s99
      %p110 = scmp.eq.s32.totalorder %s22, 0
      %p111 = por %p109, %p110
      %p112 = scmp.ne.s32.totalorder %s98, %s99
      %p113 = scmp.eq.s32.totalorder %s23, 1
      %p114 = por %p112, %p113
      %p116 = scmp.ne.s32.totalorder %s99, %s115
      %p117 = scmp.eq.s32.totalorder %s23, 0
      %p118 = por %p116, %p117
      %p119 = scmp.le.s32.totalorder 1, %s17
      %p120 = scmp.lt.s32.totalorder %s17, 3
      %p121 = pnand %p119, %p120
      %p122 = pneg %p121
      // Predicated region
      $region9: #{tpu_custom_call.1} parent=5 // pred_check
        _
      $region10: #{tpu_custom_call.1} parent=5 // pred_check_branch
        %124 = sbr.rel (%p121) target = $region12
      $region11: #{tpu_custom_call.1} parent=5 // pred_region
        %s125 = ssub.s32 %s17, 1
      $region12: #{tpu_custom_call.1} parent=5 // pred_fallthru
        _
      %p126 = scmp.lt.s32.totalorder %s17, 2
      // Predicated region
      $region13: #{tpu_custom_call.1} parent=5 // pred_check
        %p127 = pneg %p126
      $region14: #{tpu_custom_call.1} parent=5 // pred_check_branch
        %129 = sbr.rel (%p127) target = $region16
      $region15: #{tpu_custom_call.1} parent=5 // pred_region
        // Predicated region
        $region17: #{tpu_custom_call.1} parent=15 // pred_check
          %p130 = pneg %p51
        $region18: #{tpu_custom_call.1} parent=15 // pred_check_branch
          %132 = sbr.rel (%p130) target = $region20
        $region19: #{tpu_custom_call.1} parent=15 // pred_region
          %s133 = sand.u32 %s41, 1
          %s134 = scalar_lea.sflag [#allocation4], %s133
          %s135 = sand.u32 %s41, 1
          %s136 = smul.addr %s135, 8
          %s137 = scalar_lea.vmem [#allocation3], %s136
          %s138 = sadd.s32 %s24, %s25
          %s140 = ssub.s32 128, 128
          %141 = vsyncadd %s134, %s140
          %s142 = smul.addr %s138, 128
          %s143 = scalar_lea.hbm %s0, %s142
          %s145 = sshll.u32 %s137, 4
          %s146 = int_to_ptr.vmem [resolvable:$true] %s145
          %148 = dma.hbm_to_vmem [thread:$0]  %s143, 128, %s146, %s134
        $region20: #{tpu_custom_call.1} parent=15 // pred_fallthru
          _
        // Predicated region
        $region21: #{tpu_custom_call.1} parent=15 // pred_check
          %p149 = pneg %p79
        $region22: #{tpu_custom_call.1} parent=15 // pred_check_branch
          %151 = sbr.rel (%p149) target = $region24
        $region23: #{tpu_custom_call.1} parent=15 // pred_region
          %s152 = sand.u32 %s69, 1
          %s153 = scalar_lea.sflag [#allocation7], %s152
          %s154 = sand.u32 %s69, 1
          %s155 = smul.addr %s154, 8
          %s156 = scalar_lea.vmem [#allocation6], %s155
          %s157 = sadd.s32 %s24, %s25
          %s159 = ssub.s32 128, 128
          %160 = vsyncadd %s153, %s159
          %s161 = smul.addr %s157, 128
          %s162 = scalar_lea.hbm %s1, %s161
          %s164 = sshll.u32 %s156, 4
          %s165 = int_to_ptr.vmem [resolvable:$true] %s164
          %167 = dma.hbm_to_vmem [thread:$0]  %s162, 128, %s165, %s153
        $region24: #{tpu_custom_call.1} parent=15 // pred_fallthru
          _
      $region16: #{tpu_custom_call.1} parent=5 // pred_fallthru
        _
      %p168 = scmp.le.s32.totalorder 1, %s17
      %p169 = scmp.lt.s32.totalorder %s17, 3
      %p170 = pnand %p168, %p169
      %p171 = pneg %p170
      // Predicated region
      $region25: #{tpu_custom_call.1} parent=5 // pred_check
        _
      $region26: #{tpu_custom_call.1} parent=5 // pred_check_branch
        %173 = sbr.rel (%p170) target = $region28
      $region27: #{tpu_custom_call.1} parent=5 // pred_region
        %s174 = ssub.s32 %s17, 1
        %s175 = sand.u32 %s44, 1
        %s176 = scalar_lea.sflag [#allocation4], %s175
        %s177 = sand.u32 %s44, 1
        %s178 = smul.addr %s177, 8
        %s179 = scalar_lea.vmem [#allocation3], %s178
        // Predicated region
        $region29: #{tpu_custom_call.1} parent=27 // pred_check
          %p180 = pneg %p57
        $region30: #{tpu_custom_call.1} parent=27 // pred_check_branch
          %182 = sbr.rel (%p180) target = $region32
        $region31: #{tpu_custom_call.1} parent=27 // pred_region
          %183 = dma.done %s176, 128
        $region32: #{tpu_custom_call.1} parent=27 // pred_fallthru
          _
        %s184 = sand.u32 %s72, 1
        %s185 = scalar_lea.sflag [#allocation7], %s184
        %s186 = sand.u32 %s72, 1
        %s187 = smul.addr %s186, 8
        %s188 = scalar_lea.vmem [#allocation6], %s187
        // Predicated region
        $region33: #{tpu_custom_call.1} parent=27 // pred_check
          %p189 = pneg %p85
        $region34: #{tpu_custom_call.1} parent=27 // pred_check_branch
          %191 = sbr.rel (%p189) target = $region36
        $region35: #{tpu_custom_call.1} parent=27 // pred_region
          %192 = dma.done %s185, 128
        $region36: #{tpu_custom_call.1} parent=27 // pred_fallthru
          _
        %s193 = sand.u32 %s44, 1
        %s194 = scalar_lea.sflag [#allocation4], %s193
        %s195 = sand.u32 %s44, 1
        %s196 = smul.addr %s195, 8
        %s197 = scalar_lea.vmem [#allocation3], %s196
        %p198 = pneg %p57
        %p199 = pneg %p54
        %s200 = sand.u32 %s72, 1
        %s201 = scalar_lea.sflag [#allocation7], %s200
        %s202 = sand.u32 %s72, 1
        %s203 = smul.addr %s202, 8
        %s204 = scalar_lea.vmem [#allocation6], %s203
        %p205 = pneg %p85
        %p206 = pneg %p82
        %p207 = pneg %p111
        %p208 = pneg %p108
        %s209 = sand.u32 %s98, 1
        %s210 = scalar_lea.sflag [#allocation5], %s209
        %s211 = sand.u32 %s98, 1
        %s212 = smul.addr %s211, 32
        %s213 = scalar_lea.vmem [#allocation8], %s212
        %s214 = sadd.s32 %s26, %s27
        %s215 = sadd.s32 %s26, %s27
        %p216 = scmp.eq.s32.totalorder %s27, 0
        // Predicated region
        $region37: #{tpu_custom_call.1} parent=27 // pred_check
          %p217 = pneg %p216
        $region38: #{tpu_custom_call.1} parent=27 // pred_check_branch
          %219 = sbr.rel (%p217) target = $region40
        $region39: #{tpu_custom_call.1} parent=27 // pred_region
          %220 = vst [vmem:[#allocation2] sm:$0xff] 0.0
          %221 = vst [vmem:[#allocation2 + $0x8] sm:$0xff] 0.0
          %222 = vst [vmem:[#allocation2 + $0x10] sm:$0xff] 0.0
          %223 = vst [vmem:[#allocation2 + $0x18] sm:$0xff] 0.0
        $region40: #{tpu_custom_call.1} parent=27 // pred_fallthru
          _
        %v224 = vld [vmem:[%s179] sm:$0xff]
        %v225 = vld [vmem:[%s188] sm:$0xff]
        %v226 = vmax.f32 %v224, 1e-09
        %v227 = vmin.f32 %v226, 1.0
        %vm228 = vcmp.gt.f32.partialorder %v225, 0.5
        %v229 = vsub.f32 1.0, %v227
        %v230 = vsel %vm228, %v227, %v229
        %v231 = vsel %vm228, 0.5, 0.25
        %v232 = vsub.f32 0.0, %v231
        %v233 = vlog2.pop %v230
        %v234 = vmul.f32 %v233, 0.6931472
        %v235 = vmul.f32 %v232, %v234
        %v236 = vld [vmem:[#allocation2] sm:$0xff]
        %v237 = vmul.f32 %v224, %v225
        %v238 = vadd.f32 %v237, 0.0
        %v239 = vadd.f32 %v236, %v238
        %240 = vst [vmem:[#allocation2] sm:$0xff] %v239
        %s241 = scalar_lea.vmem [#allocation2], 8
        %v242 = vld [vmem:[%s241] sm:$0xff]
        %v243 = vadd.f32 %v224, 0.0
        %v244 = vadd.f32 %v242, %v243
        %245 = vst [vmem:[%s241] sm:$0xff] %v244
        %s246 = scalar_lea.vmem [#allocation2], 16
        %v247 = vld [vmem:[%s246] sm:$0xff]
        %v248 = vadd.f32 %v225, 0.0
        %v249 = vadd.f32 %v247, %v248
        %250 = vst [vmem:[%s246] sm:$0xff] %v249
        %s251 = scalar_lea.vmem [#allocation2], 24
        %v252 = vld [vmem:[%s251] sm:$0xff]
        %v253 = vadd.f32 %v235, 0.0
        %v254 = vadd.f32 %v252, %v253
        %255 = vst [vmem:[%s251] sm:$0xff] %v254
        // Predicated region
        $region41: #{tpu_custom_call.1} parent=27 // pred_check
          %p256 = pneg %p216
        $region42: #{tpu_custom_call.1} parent=27 // pred_check_branch
          %258 = sbr.rel (%p256) target = $region44
        $region43: #{tpu_custom_call.1} parent=27 // pred_region
          %v259 = vld [vmem:[#allocation2] sm:$0xff]
          %v260 = vld [vmem:[#allocation2 + $0x8] sm:$0xff]
          %v261 = vld [vmem:[#allocation2 + $0x10] sm:$0xff]
          %v262 = vld [vmem:[#allocation2 + $0x18] sm:$0xff]
          %263 = vst [vmem:[%s213] sm:$0xff] %v259
          %264 = vst [vmem:[%s213 + $0x8] sm:$0xff] %v260
          %265 = vst [vmem:[%s213 + $0x10] sm:$0xff] %v261
          %266 = vst [vmem:[%s213 + $0x18] sm:$0xff] %v262
        $region44: #{tpu_custom_call.1} parent=27 // pred_fallthru
          _
        %s267 = sand.u32 %s98, 1
        %s268 = scalar_lea.sflag [#allocation5], %s267
        %s269 = sand.u32 %s98, 1
        %s270 = smul.addr %s269, 32
        %s271 = scalar_lea.vmem [#allocation8], %s270
        // Predicated region
        $region45: #{tpu_custom_call.1} parent=27 // pred_check
          %p272 = pneg %p108
        $region46: #{tpu_custom_call.1} parent=27 // pred_check_branch
          %274 = sbr.rel (%p272) target = $region48
        $region47: #{tpu_custom_call.1} parent=27 // pred_region
          %s276 = ssub.s32 512, 512
          %277 = vsyncadd %s268, %s276
          %s278 = smul.addr %s26, 4
          %s279 = smul.addr %s278, 128
          %s280 = scalar_lea.hbm %s2, %s279
          %s281 = sshll.u32 %s271, 4
          %s282 = int_to_ptr.vmem [resolvable:$true] %s281
          %287 = dma.vmem_to_hbm [thread:$0]  %s282, 512, %s280, %s268, 128, 128, 8
        $region48: #{tpu_custom_call.1} parent=27 // pred_fallthru
          _
      $region28: #{tpu_custom_call.1} parent=5 // pred_fallthru
        _
      %p288 = scmp.le.s32.totalorder 2, %s17
      // Predicated region
      $region49: #{tpu_custom_call.1} parent=5 // pred_check
        %p289 = pneg %p288
      $region50: #{tpu_custom_call.1} parent=5 // pred_check_branch
        %291 = sbr.rel (%p289) target = $region52
      $region51: #{tpu_custom_call.1} parent=5 // pred_region
        %s292 = ssub.s32 %s17, 2
        // Predicated region
        $region53: #{tpu_custom_call.1} parent=51 // pred_check
          %p293 = pneg %p114
        $region54: #{tpu_custom_call.1} parent=51 // pred_check_branch
          %295 = sbr.rel (%p293) target = $region56
        $region55: #{tpu_custom_call.1} parent=51 // pred_region
          %s296 = sand.u32 %s99, 1
          %s297 = scalar_lea.sflag [#allocation5], %s296
          %s298 = sand.u32 %s99, 1
          %s299 = smul.addr %s298, 32
          %s300 = scalar_lea.vmem [#allocation8], %s299
          %301 = dma.done %s297, 512
        $region56: #{tpu_custom_call.1} parent=51 // pred_fallthru
          _
      $region52: #{tpu_custom_call.1} parent=5 // pred_fallthru
        _
    $region6: #{tpu_custom_call.1} parent=1 // loop_footer
      %s21 = sadd.s32 1, %s17
    $region7: #{tpu_custom_call.1} parent=1 // loop_footer_branch
      %16 = sbr.rel target = $region3
    $region8: #{tpu_custom_call.1} parent=1 // loop_exit
      _
    %302 = vsyncpa [#allocation4], 1
    %s303 = scalar_lea.sflag [#allocation4], 1
    %304 = vsyncpa %s303, 1
    %305 = vsyncpa [#allocation7], 1
    %s306 = scalar_lea.sflag [#allocation7], 1
    %307 = vsyncpa %s306, 1
    %308 = vsyncpa [#allocation5], 1
    %s309 = scalar_lea.sflag [#allocation5], 1
    %310 = vsyncpa %s309, 1

</llo_original>
